<compile_context>
chip_gen: v7x
topology: tpu7x:2x2x1
jax: 0.10.0
libtpu: 0.0.40
codegen_flags: <defaults>
</compile_context>

<pallas_src>
import math

import jax
import jax.numpy as jnp
from jax.experimental import pallas as pl
from jax.experimental.pallas import tpu as pltpu

NUM_ANGLE_CLASS = 8
IN_CHANNELS = 16          # 8 class logits + 1 residual + 7 passthrough features
OUT_CHANNELS = 9          # cos, sin + 7 passthrough features
ANGLE_PER_CLASS = 2.0 * math.pi / float(NUM_ANGLE_CLASS)


def _round_up(n: int, m: int) -> int:
    return ((n + m - 1) // m) * m


def _cos_sin_kernel(xt_ref, cs_ref):
    """One grid step: channels-first tile (9, TN) -> (2, TN) [cos; sin].

    xt_ref rows: 0..7 = angle-class logits, 8 = angle residual. N on lanes.
    """
    logits = xt_ref[0:NUM_ANGLE_CLASS, :].astype(jnp.float32)            # (8, TN)
    residual = xt_ref[NUM_ANGLE_CLASS:NUM_ANGLE_CLASS + 1, :].astype(jnp.float32)  # (1, TN)

    # argmax over the 8 class logits (first-max semantics), done with
    # max + iota + min so it lowers to cheap 8-sublane VPU/XLU reductions.
    # NOTE: if a logit column contains NaN, no element equals the max and the
    # class falls back to the sentinel (8); matches "garbage in, garbage out".
    m = jnp.max(logits, axis=0, keepdims=True)                            # (1, TN)
    idx = jax.lax.broadcasted_iota(jnp.int32, logits.shape, 0)            # (8, TN)
    sentinel = jnp.full_like(idx, NUM_ANGLE_CLASS)
    angle_class = jnp.min(jnp.where(logits == m, idx, sentinel),
                          axis=0, keepdims=True)                          # (1, TN) int32

    # class2angle: angle = class * (2*pi/8) + residual  (always in f32)
    angle = angle_class.astype(jnp.float32) * ANGLE_PER_CLASS + residual  # (1, TN)

    # Direct slice stores — no concatenate, no extra VMEM temporary.
    cs_ref[0:1, :] = jnp.cos(angle).astype(cs_ref.dtype)
    cs_ref[1:2, :] = jnp.sin(angle).astype(cs_ref.dtype)


def parse_batch(x, *, tile_n: int = 2048):
    """Pallas equivalent of BaseUNet.parse_batch. x: (B, N, 16) -> (B, N, 9)."""
    B, N, C = x.shape
    assert C == IN_CHANNELS, f"expected {IN_CHANNELS} channels, got {C}"
    dtype = x.dtype

    # Lane-dense, channels-first slab of only the 9 channels the kernel needs.
    xt = jnp.transpose(x[:, :, :NUM_ANGLE_CLASS + 1], (0, 2, 1))          # (B, 9, N)

    # Tile the point axis; keep tiles lane-aligned (multiple of 128) and small
    # enough to double-buffer comfortably on all generations (incl. v7x 64 MiB).
    tn = min(tile_n, _round_up(N, 128))
    n_pad = _round_up(N, tn)
    if n_pad != N:
        xt = jnp.pad(xt, ((0, 0), (0, 0), (0, n_pad - N)))

    cs = pl.pallas_call(
        _cos_sin_kernel,
        out_shape=jax.ShapeDtypeStruct((B, 2, n_pad), dtype),
        grid_spec=pl.GridSpec(
            grid=(B, n_pad // tn),
            in_specs=[pl.BlockSpec((None, NUM_ANGLE_CLASS + 1, tn),
                                   lambda b, n: (b, 0, n))],
            out_specs=pl.BlockSpec((None, 2, tn), lambda b, n: (b, 0, n)),
        ),
        compiler_params=pltpu.CompilerParams(
            dimension_semantics=("parallel", "parallel")),
    )(xt)

    # Back to (B, N, 2) and let XLA append the 7 passthrough channels verbatim.
    n1 = jnp.transpose(cs[:, :, :N], (0, 2, 1))                           # (B, N, 2)
    out = jnp.concatenate([n1, x[:, :, NUM_ANGLE_CLASS + 1:]], axis=2)    # (B, N, 9)
    assert out.shape == (B, N, OUT_CHANNELS)
    return out


def parse_batch_ref(x):
    """Pure-JAX reference mirroring the PyTorch code exactly."""
    angle_class = jnp.argmax(x[:, :, :NUM_ANGLE_CLASS], axis=2)
    angle = (angle_class.astype(jnp.float32) * ANGLE_PER_CLASS
             + x[:, :, NUM_ANGLE_CLASS].astype(jnp.float32))
    n1 = jnp.stack([jnp.cos(angle), jnp.sin(angle)], axis=2).astype(x.dtype)
    return jnp.concatenate([n1, x[:, :, NUM_ANGLE_CLASS + 1:]], axis=2)


if __name__ == "__main__":
    key = jax.random.PRNGKey(0)
    B, N = 2, 8
    x = jax.random.normal(key, (B, N, IN_CHANNELS), dtype=jnp.float32)

    out = parse_batch(x)
    out = jax.block_until_ready(out)

    ref = parse_batch_ref(x)
    assert out.shape == (B, N, OUT_CHANNELS), out.shape
    assert jnp.allclose(out, ref, atol=1e-5, rtol=1e-5), "mismatch vs reference"

    print("KERNEL_OK")
</pallas_src>

<mosaic_0001>
module attributes {stable_mosaic.version = 11 : i64} {
  func.func @_cos_sin_kernel(%arg0: i32, %arg1: i32, %arg2: memref<1x9x128xf32, #tpu.memory_space<vmem>>, %arg3: memref<1x2x128xf32, #tpu.memory_space<vmem>>) attributes {dimension_semantics = [#tpu.dimension_semantics<parallel>, #tpu.dimension_semantics<parallel>], iteration_bounds = array<i64: 2, 1>, scalar_prefetch = 0 : i64, scratch_operands = 0 : i64, tpu.core_type = #tpu.core_type<tc>, window_params = [{transform_indices = @transform_0, window_bounds = array<i64: 1, 9, 128>}, {transform_indices = @transform_1, window_bounds = array<i64: 1, 2, 128>}]} {
    %c0 = arith.constant 0 : index
    %c0_0 = arith.constant 0 : index
    %c0_1 = arith.constant 0 : index
    %0 = vector.load %arg2[%c0, %c0_0, %c0_1] : memref<1x9x128xf32, #tpu.memory_space<vmem>>, vector<1x8x128xf32>
    %1 = vector.shape_cast %0 : vector<1x8x128xf32> to vector<8x128xf32>
    %c0_2 = arith.constant 0 : index
    %c8 = arith.constant 8 : index
    %c0_3 = arith.constant 0 : index
    %2 = vector.load %arg2[%c0_2, %c8, %c0_3] : memref<1x9x128xf32, #tpu.memory_space<vmem>>, vector<1x1x128xf32>
    %3 = vector.shape_cast %2 : vector<1x1x128xf32> to vector<1x128xf32>
    %cst = arith.constant dense<0xFF800000> : vector<128xf32>
    %4 = vector.multi_reduction <maximumf>, %1, %cst [0] : vector<8x128xf32> to vector<128xf32>
    %5 = vector.shape_cast %4 : vector<128xf32> to vector<1x128xf32>
    %6 = tpu.iota {dimensions = array<i32: 0>} : vector<8x128xi32>
    %c8_i32 = arith.constant 8 : i32
    %7 = vector.broadcast %c8_i32 : i32 to vector<8x128xi32>
    %8 = vector.broadcast %5 : vector<1x128xf32> to vector<8x128xf32>
    %9 = arith.cmpf oeq, %1, %8 : vector<8x128xf32>
    %10 = arith.select %9, %6, %7 : vector<8x128xi1>, vector<8x128xi32>
    %cst_4 = arith.constant dense<2147483647> : vector<128xi32>
    %11 = vector.multi_reduction <minsi>, %10, %cst_4 [0] : vector<8x128xi32> to vector<128xi32>
    %12 = vector.shape_cast %11 : vector<128xi32> to vector<1x128xi32>
    %13 = arith.sitofp %12 : vector<1x128xi32> to vector<1x128xf32>
    %cst_5 = arith.constant 0.785398185 : f32
    %14 = vector.broadcast %cst_5 : f32 to vector<1x128xf32>
    %15 = arith.mulf %13, %14 : vector<1x128xf32>
    %16 = arith.addf %15, %3 : vector<1x128xf32>
    %17 = math.cos %16 : vector<1x128xf32>
    %c0_6 = arith.constant 0 : index
    %c0_7 = arith.constant 0 : index
    %c0_8 = arith.constant 0 : index
    %18 = vector.load %arg3[%c0_6, %c0_7, %c0_8] : memref<1x2x128xf32, #tpu.memory_space<vmem>>, vector<1x1x128xf32>
    %19 = vector.shape_cast %18 : vector<1x1x128xf32> to vector<1x128xf32>
    %20 = vector.shape_cast %17 : vector<1x128xf32> to vector<1x1x128xf32>
    tpu.vector_store %arg3[%c0_6, %c0_7, %c0_8], %20 {strides = array<i32>} : memref<1x2x128xf32, #tpu.memory_space<vmem>>, vector<1x1x128xf32>,
    %21 = math.sin %16 : vector<1x128xf32>
    %c0_9 = arith.constant 0 : index
    %c1 = arith.constant 1 : index
    %c0_10 = arith.constant 0 : index
    %22 = vector.load %arg3[%c0_9, %c1, %c0_10] : memref<1x2x128xf32, #tpu.memory_space<vmem>>, vector<1x1x128xf32>
    %23 = vector.shape_cast %22 : vector<1x1x128xf32> to vector<1x128xf32>
    %24 = vector.shape_cast %21 : vector<1x128xf32> to vector<1x1x128xf32>
    tpu.vector_store %arg3[%c0_9, %c1, %c0_10], %24 {strides = array<i32>} : memref<1x2x128xf32, #tpu.memory_space<vmem>>, vector<1x1x128xf32>,
    return
  }
  func.func @transform_0(%arg0: i32, %arg1: i32) -> (i32, i32, i32) {
    %c0_i32 = arith.constant 0 : i32
    %c0_i32_0 = arith.constant 0 : i32
    return %arg0, %c0_i32, %arg1 : i32, i32, i32
  }
  func.func @transform_1(%arg0: i32, %arg1: i32) -> (i32, i32, i32) {
    %c0_i32 = arith.constant 0 : i32
    %c0_i32_0 = arith.constant 0 : i32
    return %arg0, %c0_i32, %arg1 : i32, i32, i32
  }
}

</mosaic_0001>

<llo_original>
// kernel: tpu_custom_call.1
$region0: #{tpu_custom_call.1}
  #allocation0 [shape = 'u32[]', space=smem, size = 0x4, offset = 0x4, fixed_abs, tag = 'smem constant byte address 0x4 - core index']
  #allocation1 [shape = 'u32[144,128]{1,0:T(1,128)}', space=vmem, size = 0x12000, scoped, tag = 'internal scratch']
  %s0 = inlined_call_operand.vmem [shape: f32[2,9,128], index: 0, kind: input, shape index: {}]
  %s1 = inlined_call_operand.hbm [shape: f32[2,2,128], index: 1, kind: output, shape index: {}]
  %s2 = sld [smem:[#allocation0]]
  $region37: #{tpu_custom_call.1} parent=0
    _
  %s4 = ssub.s32 1, %s2
  %s5 = scalar_select 0, %s4, %s2
  $region1: #{tpu_custom_call.1} parent=0
    #allocation2 [shape = 'u8[2048]{0}', space=vmem, size = 0x800, scoped, tag = 'output window, operand 0']
    #allocation3 [shape = 's32[2]{0}', space=sflag, size = 0x8, scoped, tag = 'scoped memory for tpu_custom_call.1']
    %6 = vsyncpa [#allocation3], 0
    %s7 = scalar_lea.sflag [#allocation3], 1
    %8 = vsyncpa %s7, 0
    loop: start=0, step=1, limit=4
    $region2: #{tpu_custom_call.1} parent=1 // loop_pre_header
      _
    $region3: #{tpu_custom_call.1} parent=1 // loop_header
      %s10 = sphi 0, %s14
      %p11 = scmp.ge.s32.totalorder %s10, 4
      %s17 = sphi 0, %s29
      %s18 = sphi 0, %s25
      %s19 = sphi 0, %s17
      %s20 = sphi 0, %s18
      %s21 = sphi 0, %s19
      %s22 = sphi 0, %s20
      %s34 = sphi 0, %s36
      %s37 = sphi 0, %s34
      %s38 = sphi 0, %s37
      %s54 = sphi 0, %s38
      %s62 = sphi 0, %s64
      %s65 = sphi 0, %s62
      %s66 = sphi 0, %s65
      %s82 = sphi 0, %s66
    $region4: #{tpu_custom_call.1} parent=1 // loop_header_branch
      %13 = sbr.rel (%p11) target = $region8
    $region5: #{tpu_custom_call.1} parent=1 // loop_body
      %s15 = ssub.s32 %s10, 1
      %s16 = ssub.s32 %s10, 2
      %s23 = sadd.s32 1, %s18
      %p24 = scmp.ge.s32.totalorder %s23, 1
      %s25 = scalar_select %p24, 0, %s23
      %s26 = sadd.s32 1, %s17
      %s27 = scalar_select %p24, %s26, %s17
      %p28 = scmp.ge.s32.totalorder %s27, 2
      %s29 = scalar_select %p28, 0, %s27
      %s30 = ssub.s32 %s17, %s29
      %s31 = ssub.s32 %s18, %s25
      %s32 = sor.u32 %s30, %s31
      %p33 = scmp.eq.s32.totalorder %s32, 0
      %s35 = sadd.s32 %s34, 1
      %s36 = scalar_select %p33, %s34, %s35
      %p39 = pneg %p33
      %p40 = scmp.eq.s32.totalorder %s10, 1
      %p41 = por %p39, %p40
      %p42 = scmp.ne.s32.totalorder %s34, %s37
      %p43 = scmp.eq.s32.totalorder %s10, 0
      %p44 = por %p42, %p43
      %p45 = scmp.ne.s32.totalorder %s34, %s37
      %p46 = scmp.eq.s32.totalorder %s15, 1
      %p47 = por %p45, %p46
      %p48 = scmp.ne.s32.totalorder %s37, %s38
      %p49 = scmp.eq.s32.totalorder %s15, 0
      %p50 = por %p48, %p49
      %p51 = scmp.ne.s32.totalorder %s37, %s38
      %p52 = scmp.eq.s32.totalorder %s16, 1
      %p53 = por %p51, %p52
      %p55 = scmp.ne.s32.totalorder %s38, %s54
      %p56 = scmp.eq.s32.totalorder %s16, 0
      %p57 = por %p55, %p56
      %s58 = ssub.s32 %s17, %s29
      %s59 = ssub.s32 %s18, %s25
      %s60 = sor.u32 %s58, %s59
      %p61 = scmp.eq.s32.totalorder %s60, 0
      %s63 = sadd.s32 %s62, 1
      %s64 = scalar_select %p61, %s62, %s63
      %p67 = pneg %p61
      %p68 = scmp.eq.s32.totalorder %s10, 1
      %p69 = por %p67, %p68
      %p70 = scmp.ne.s32.totalorder %s62, %s65
      %p71 = scmp.eq.s32.totalorder %s10, 0
      %p72 = por %p70, %p71
      %p73 = scmp.ne.s32.totalorder %s62, %s65
      %p74 = scmp.eq.s32.totalorder %s15, 1
      %p75 = por %p73, %p74
      %p76 = scmp.ne.s32.totalorder %s65, %s66
      %p77 = scmp.eq.s32.totalorder %s15, 0
      %p78 = por %p76, %p77
      %p79 = scmp.ne.s32.totalorder %s65, %s66
      %p80 = scmp.eq.s32.totalorder %s16, 1
      %p81 = por %p79, %p80
      %p83 = scmp.ne.s32.totalorder %s66, %s82
      %p84 = scmp.eq.s32.totalorder %s16, 0
      %p85 = por %p83, %p84
      %p86 = scmp.le.s32.totalorder 1, %s10
      %p87 = scmp.lt.s32.totalorder %s10, 3
      %p88 = pnand %p86, %p87
      %p89 = pneg %p88
      // Predicated region
      $region9: #{tpu_custom_call.1} parent=5 // pred_check
        _
      $region10: #{tpu_custom_call.1} parent=5 // pred_check_branch
        %91 = sbr.rel (%p88) target = $region12
      $region11: #{tpu_custom_call.1} parent=5 // pred_region
        %s92 = ssub.s32 %s10, 1
      $region12: #{tpu_custom_call.1} parent=5 // pred_fallthru
        _
      %p93 = scmp.lt.s32.totalorder %s10, 2
      // Predicated region
      $region13: #{tpu_custom_call.1} parent=5 // pred_check
        %p94 = pneg %p93
      $region14: #{tpu_custom_call.1} parent=5 // pred_check_branch
        %96 = sbr.rel (%p94) target = $region16
      $region15: #{tpu_custom_call.1} parent=5 // pred_region
        // Predicated region
        $region17: #{tpu_custom_call.1} parent=15 // pred_check
          %p97 = pneg %p44
        $region18: #{tpu_custom_call.1} parent=15 // pred_check_branch
          %99 = sbr.rel (%p97) target = $region20
        $region19: #{tpu_custom_call.1} parent=15 // pred_region
          %p100 = scmp.lt.s32.totalorder %s17, 1
          %s101 = scalar_select %p100, %s17, 1
          %p102 = scmp.lt.s32.totalorder %s18, 0
          %s103 = scalar_select %p102, %s18, 0
          %s104 = smul.addr %s101, 2
          %s105 = sadd.s32 %s103, %s104
          %s106 = smul.addr %s105, 8
          %s107 = scalar_lea.vmem %s0, %s106
        $region20: #{tpu_custom_call.1} parent=15 // pred_fallthru
          _
      $region16: #{tpu_custom_call.1} parent=5 // pred_fallthru
        _
      %p108 = scmp.le.s32.totalorder 1, %s10
      %p109 = scmp.lt.s32.totalorder %s10, 3
      %p110 = pnand %p108, %p109
      %p111 = pneg %p110
      // Predicated region
      $region21: #{tpu_custom_call.1} parent=5 // pred_check
        _
      $region22: #{tpu_custom_call.1} parent=5 // pred_check_branch
        %113 = sbr.rel (%p110) target = $region24
      $region23: #{tpu_custom_call.1} parent=5 // pred_region
        %s114 = ssub.s32 %s10, 1
        %p115 = scmp.lt.s32.totalorder %s19, 1
        %s116 = scalar_select %p115, %s19, 1
        %p117 = scmp.lt.s32.totalorder %s20, 0
        %s118 = scalar_select %p117, %s20, 0
        %s119 = smul.addr %s116, 2
        %s120 = sadd.s32 %s118, %s119
        %s121 = smul.addr %s120, 8
        %s122 = scalar_lea.vmem %s0, %s121
        %p123 = pneg %p50
        %p124 = pneg %p47
        %p125 = pneg %p78
        %p126 = pneg %p75
        %s127 = sand.u32 %s65, 1
        %s128 = scalar_lea.sflag [#allocation3], %s127
        %s129 = sand.u32 %s65, 1
        %s130 = smul.addr %s129, 2
        %s131 = scalar_lea.vmem [#allocation2], %s130
        %p132 = scmp.lt.s32.totalorder %s19, 1
        %s133 = scalar_select %p132, %s19, 1
        %p134 = scmp.lt.s32.totalorder %s20, 0
        %s135 = scalar_select %p134, %s20, 0
        %s136 = smul.addr %s133, 2
        %s137 = sadd.s32 %s135, %s136
        %s138 = smul.addr %s137, 8
        %s139 = scalar_lea.vmem %s0, %s138
        %v140 = vld [vmem:[%s139] sm:$0xff]
        %v141 = vld [vmem:[%s139 + $0x8] sm:$0x1]
        %v142 = vrot.slane %v140, 4
        %v143 = vmax.f32 %v140, %v142
        %v144 = vrot.slane %v143, 2
        %v145 = vmax.f32 %v143, %v144
        %v146 = vrot.slane %v145, 1
        %v147 = vmax.f32 %v145, %v146
        %v148 = vlaneseq
        %v149 = vshrl.u32 %v148, 7
        %vm150 = vcmp.eq.f32.partialorder %v140, %v147
        %v151 = vsel %vm150, %v149, 8
        %v152 = vrot.slane %v151, 4
        %vm153 = vcmp.lt.s32.totalorder %v151, %v152
        %v154 = vsel %vm153, %v151, %v152
        %v155 = vrot.slane %v154, 2
        %vm156 = vcmp.lt.s32.totalorder %v154, %v155
        %v157 = vsel %vm156, %v154, %v155
        %v158 = vrot.slane %v157, 1
        %vm159 = vcmp.lt.s32.totalorder %v157, %v158
        %v160 = vsel %vm159, %v157, %v158
        %v161 = vcvt.s32.f32 %v160
        %v162 = vmul.f32 %v161, 0.7853982
        %v163 = vadd.f32 %v162, %v141
        %v164 = vand.u32 2147483647, %v163
        %vm165 = vcmp.le.f32.partialorder %v164, 0.7853982
        %vm166 = vcmp.lt.s32.totalorder %v163, 0
        %v167 = vand.u32 %v163, 2139095040
        %v168 = vshrl.u32 %v167, 23
        %v169 = vsub.s32 %v168, 127
        %v170 = vand.u32 2147483647, %v163
        %v171 = vand.u32 %v170, 8388607
        %v172 = vor.u32 %v171, 8388608
        %v173 = vsub.s32 0, %v172
        %v174 = vadd.s32 %v169, 1
        %vm175 = vcmp.gt.s32.totalorder %v174, 0
        %v176 = vsel %vm175, %v174, 0
        %v177 = vshrl.u32 %v176, 5
        %v178 = vand.u32 %v176, 31
        %v179 = vsub.s32 32, %v178
        %v180 = vshrl.u32 683565275, %v179
        %v181 = vshll.u32 683565275, %v178
        %v182 = vshrl.u32 2475754826, %v179
        %v183 = vor.u32 %v181, %v182
        %v184 = vshll.u32 2475754826, %v178
        %v185 = vshrl.u32 2131351028, %v179
        %v186 = vor.u32 %v184, %v185
        %v187 = vshll.u32 2131351028, %v178
        %v188 = vshrl.u32 2102212464, %v179
        %v189 = vor.u32 %v187, %v188
        %v190 = vshll.u32 2102212464, %v178
        %v191 = vshrl.u32 920167782, %v179
        %v192 = vor.u32 %v190, %v191
        %v193 = vshll.u32 920167782, %v178
        %v194 = vshrl.u32 1326507024, %v179
        %v195 = vor.u32 %v193, %v194
        %vm196 = vcmp.lt.s32.totalorder %v177, 1
        %vm197 = vcmp.lt.s32.totalorder %v177, 2
        %vm198 = vcmp.lt.s32.totalorder %v177, 3
        %vm199 = vcmp.lt.s32.totalorder %v177, 4
        %v200 = vsel %vm196, %v180, %v183
        %v201 = vsel %vm199, %v189, 2102212464
        %v202 = vsel %vm198, %v186, %v201
        %v203 = vsel %vm197, %v200, %v202
        %v204 = vsel %vm196, %v183, %v186
        %v205 = vsel %vm199, %v192, 920167782
        %v206 = vsel %vm198, %v189, %v205
        %v207 = vsel %vm197, %v204, %v206
        %v208 = vsel %vm196, %v186, %v189
        %v209 = vsel %vm199, %v195, 1326507024
        %v210 = vsel %vm198, %v192, %v209
        %v211 = vsel %vm197, %v208, %v210
        %v212 = vshll.u32 %v172, 8
        %v213 = vmul.u32.u64.compose %v212, %v211
        %v214 = vextract.low.u32 %v213
        %v215 = vextract.high.u32 %v213
        %v216 = vmul.u32.u64.compose %v212, %v207
        %v217 = vextract.low.u32 %v216
        %v218 = vextract.high.u32 %v216
        %v219 = vmul.u32 %v212, %v203
        %v220 = vadd.s32 %v215, %v217
        %vm221 = vc.u32 %v215, %v217
        %v222 = vadd.s32 %v218, 1
        %v223 = vsel %vm221, %v222, %v218
        %v224 = vadd.s32 %v219, %v223
        %v225 = vadd.s32 %v224, 536870912
        %v226 = vshrl.u32 %v225, 30
        %v227 = vshll.u32 %v226, 30
        %v228 = vsub.s32 %v224, %v227
        %vm229 = vcmp.lt.s32.totalorder %v228, 0
        %v230 = vsub.s32 0, %v228
        %v231 = vsel %vm229, %v230, %v228
        %v232 = vclz %v231
        %v233 = vsub.s32 %v232, 2
        %vm234 = vcmp.gt.s32.totalorder 0, %v233
        %v235 = vsel %vm234, 0, %v233
        %v236 = vsub.s32 32, %v235
        %v237 = vshll.u32 %v228, %v235
        %v238 = vshrl.u32 %v220, %v236
        %v239 = vor.u32 %v237, %v238
        %v240 = vsub.s32 4294967266, %v235
        %v241 = vadd.s32 %v240, 127
        %v242 = vshll.u32 %v241, 23
        %v243 = vor.u32 4788187, %v242
        %v244 = vand.u32 2147483647, %v243
        %v246 = vcvt.s32.f32 %v239
        %v247 = vmul.f32 %v246, %v244
        %v248 = vxor.u32 %v247, 2147483648
        %v249 = vsel %vm166, %v248, %v247
        %v250 = vsub.s32 4, %v226
        %v251 = vsel %vm166, %v250, %v226
        %v252 = vsel %vm165, %v163, %v249
        %v253 = vsel %vm165, 0, %v251
        %v254 = vcosq.f32.pop %v252
        %v255 = vsinq.f32.pop %v252
        %vm256 = vweird.f32 %v163
        %v257 = vand.u32 %v253, 3
        %vm258 = vcmp.lt.s32.totalorder %v257, 2
        %vm259 = vcmp.eq.s32.totalorder %v257, 0
        %v260 = vxor.u32 %v255, 2147483648
        %v261 = vsel %vm259, %v254, %v260
        %vm262 = vcmp.eq.s32.totalorder %v257, 2
        %v263 = vxor.u32 %v254, 2147483648
        %v264 = vsel %vm262, %v263, %v255
        %v265 = vsel %vm258, %v261, %v264
        %v266 = vsel %vm256, nan, %v265
        %267 = vst [vmem:[%s131] sm:$0x1] %v266
        %v268 = vand.u32 2147483647, %v163
        %vm269 = vcmp.le.f32.partialorder %v268, 0.7853982
        %vm270 = vcmp.lt.s32.totalorder %v163, 0
        %v271 = vand.u32 %v163, 2139095040
        %v272 = vshrl.u32 %v271, 23
        %v273 = vsub.s32 %v272, 127
        %v274 = vand.u32 2147483647, %v163
        %v275 = vand.u32 %v274, 8388607
        %v276 = vor.u32 %v275, 8388608
        %v277 = vsub.s32 0, %v276
        %v278 = vadd.s32 %v273, 1
        %vm279 = vcmp.gt.s32.totalorder %v278, 0
        %v280 = vsel %vm279, %v278, 0
        %v281 = vshrl.u32 %v280, 5
        %v282 = vand.u32 %v280, 31
        %v283 = vsub.s32 32, %v282
        %v284 = vshrl.u32 683565275, %v283
        %v285 = vshll.u32 683565275, %v282
        %v286 = vshrl.u32 2475754826, %v283
        %v287 = vor.u32 %v285, %v286
        %v288 = vshll.u32 2475754826, %v282
        %v289 = vshrl.u32 2131351028, %v283
        %v290 = vor.u32 %v288, %v289
        %v291 = vshll.u32 2131351028, %v282
        %v292 = vshrl.u32 2102212464, %v283
        %v293 = vor.u32 %v291, %v292
        %v294 = vshll.u32 2102212464, %v282
        %v295 = vshrl.u32 920167782, %v283
        %v296 = vor.u32 %v294, %v295
        %v297 = vshll.u32 920167782, %v282
        %v298 = vshrl.u32 1326507024, %v283
        %v299 = vor.u32 %v297, %v298
        %vm300 = vcmp.lt.s32.totalorder %v281, 1
        %vm301 = vcmp.lt.s32.totalorder %v281, 2
        %vm302 = vcmp.lt.s32.totalorder %v281, 3
        %vm303 = vcmp.lt.s32.totalorder %v281, 4
        %v304 = vsel %vm300, %v284, %v287
        %v305 = vsel %vm303, %v293, 2102212464
        %v306 = vsel %vm302, %v290, %v305
        %v307 = vsel %vm301, %v304, %v306
        %v308 = vsel %vm300, %v287, %v290
        %v309 = vsel %vm303, %v296, 920167782
        %v310 = vsel %vm302, %v293, %v309
        %v311 = vsel %vm301, %v308, %v310
        %v312 = vsel %vm300, %v290, %v293
        %v313 = vsel %vm303, %v299, 1326507024
        %v314 = vsel %vm302, %v296, %v313
        %v315 = vsel %vm301, %v312, %v314
        %v316 = vshll.u32 %v276, 8
        %v317 = vmul.u32.u64.compose %v316, %v315
        %v318 = vextract.low.u32 %v317
        %v319 = vextract.high.u32 %v317
        %v320 = vmul.u32.u64.compose %v316, %v311
        %v321 = vextract.low.u32 %v320
        %v322 = vextract.high.u32 %v320
        %v323 = vmul.u32 %v316, %v307
        %v324 = vadd.s32 %v319, %v321
        %vm325 = vc.u32 %v319, %v321
        %v326 = vadd.s32 %v322, 1
        %v327 = vsel %vm325, %v326, %v322
        %v328 = vadd.s32 %v323, %v327
        %v329 = vadd.s32 %v328, 536870912
        %v330 = vshrl.u32 %v329, 30
        %v331 = vshll.u32 %v330, 30
        %v332 = vsub.s32 %v328, %v331
        %vm333 = vcmp.lt.s32.totalorder %v332, 0
        %v334 = vsub.s32 0, %v332
        %v335 = vsel %vm333, %v334, %v332
        %v336 = vclz %v335
        %v337 = vsub.s32 %v336, 2
        %vm338 = vcmp.gt.s32.totalorder 0, %v337
        %v339 = vsel %vm338, 0, %v337
        %v340 = vsub.s32 32, %v339
        %v341 = vshll.u32 %v332, %v339
        %v342 = vshrl.u32 %v324, %v340
        %v343 = vor.u32 %v341, %v342
        %v344 = vsub.s32 4294967266, %v339
        %v345 = vadd.s32 %v344, 127
        %v346 = vshll.u32 %v345, 23
        %v347 = vor.u32 4788187, %v346
        %v348 = vand.u32 2147483647, %v347
        %v350 = vcvt.s32.f32 %v343
        %v351 = vmul.f32 %v350, %v348
        %v352 = vxor.u32 %v351, 2147483648
        %v353 = vsel %vm270, %v352, %v351
        %v354 = vsub.s32 4, %v330
        %v355 = vsel %vm270, %v354, %v330
        %v356 = vsel %vm269, %v163, %v353
        %v357 = vsel %vm269, 0, %v355
        %v358 = vcosq.f32.pop %v356
        %v359 = vsinq.f32.pop %v356
        %vm360 = vweird.f32 %v163
        %v361 = vadd.s32 %v357, 3
        %v362 = vand.u32 %v361, 3
        %vm363 = vcmp.lt.s32.totalorder %v362, 2
        %vm364 = vcmp.eq.s32.totalorder %v362, 0
        %v365 = vxor.u32 %v359, 2147483648
        %v366 = vsel %vm364, %v358, %v365
        %vm367 = vcmp.eq.s32.totalorder %v362, 2
        %v368 = vxor.u32 %v358, 2147483648
        %v369 = vsel %vm367, %v368, %v359
        %v370 = vsel %vm363, %v366, %v369
        %v371 = vsel %vm360, nan, %v370
        %372 = vst [vmem:[%s131 + $0x1] sm:$0x1] %v371
        %s373 = sand.u32 %s65, 1
        %s374 = scalar_lea.sflag [#allocation3], %s373
        %s375 = sand.u32 %s65, 1
        %s376 = smul.addr %s375, 2
        %s377 = scalar_lea.vmem [#allocation2], %s376
        // Predicated region
        $region25: #{tpu_custom_call.1} parent=23 // pred_check
          %p378 = pneg %p75
        $region26: #{tpu_custom_call.1} parent=23 // pred_check_branch
          %380 = sbr.rel (%p378) target = $region28
        $region27: #{tpu_custom_call.1} parent=23 // pred_region
          %s382 = ssub.s32 32, 32
          %383 = vsyncadd %s374, %s382
          %s384 = sadd.s32 %s20, %s19
          %s385 = smul.addr %s384, 32
          %s386 = scalar_lea.hbm %s1, %s385
          %s388 = sshll.u32 %s377, 4
          %s389 = int_to_ptr.vmem [resolvable:$true] %s388
          %391 = dma.vmem_to_hbm [thread:$0]  %s389, 32, %s386, %s374
        $region28: #{tpu_custom_call.1} parent=23 // pred_fallthru
          _
      $region24: #{tpu_custom_call.1} parent=5 // pred_fallthru
        _
      %p392 = scmp.le.s32.totalorder 2, %s10
      // Predicated region
      $region29: #{tpu_custom_call.1} parent=5 // pred_check
        %p393 = pneg %p392
      $region30: #{tpu_custom_call.1} parent=5 // pred_check_branch
        %395 = sbr.rel (%p393) target = $region32
      $region31: #{tpu_custom_call.1} parent=5 // pred_region
        %s396 = ssub.s32 %s10, 2
        // Predicated region
        $region33: #{tpu_custom_call.1} parent=31 // pred_check
          %p397 = pneg %p81
        $region34: #{tpu_custom_call.1} parent=31 // pred_check_branch
          %399 = sbr.rel (%p397) target = $region36
        $region35: #{tpu_custom_call.1} parent=31 // pred_region
          %s400 = sand.u32 %s66, 1
          %s401 = scalar_lea.sflag [#allocation3], %s400
          %s402 = sand.u32 %s66, 1
          %s403 = smul.addr %s402, 2
          %s404 = scalar_lea.vmem [#allocation2], %s403
          %405 = dma.done %s401, 32
        $region36: #{tpu_custom_call.1} parent=31 // pred_fallthru
          _
      $region32: #{tpu_custom_call.1} parent=5 // pred_fallthru
        _
    $region6: #{tpu_custom_call.1} parent=1 // loop_footer
      %s14 = sadd.s32 1, %s10
    $region7: #{tpu_custom_call.1} parent=1 // loop_footer_branch
      %9 = sbr.rel target = $region3
    $region8: #{tpu_custom_call.1} parent=1 // loop_exit
      _
    %406 = vsyncpa [#allocation3], 1
    %s407 = scalar_lea.sflag [#allocation3], 1
    %408 = vsyncpa %s407, 1

</llo_original>
